<compile_context>
chip_gen: v7x
topology: tpu7x:2x2x1
jax: 0.10.0
libtpu: 0.0.40
codegen_flags: <defaults>
</compile_context>

<pallas_src>
import jax
import jax.numpy as jnp
from jax.experimental import pallas as pl
from jax.experimental.pallas import tpu as pltpu


def _round_up(n: int, m: int) -> int:
    return ((n + m - 1) // m) * m


def _is_v7x() -> bool:
    try:
        kind = jax.devices()[0].device_kind.lower()
    except Exception:
        return False
    return ("v7" in kind) or ("tpu7" in kind)


def _derive_vmem_limit(tm: int, emb: int, layer_dims, weight_buf_count: int) -> int:
    """Derive a VMEM budget from the buffers this call actually allocates.

    layer_dims: list of (in_dim, out_dim) for every Linear (including the last).
    """
    f32, bf16 = 4, 2
    # Resident weights / biases (bf16 hidden weights, f32 biases / last row).
    w_bytes = 0
    for (din, dout) in layer_dims[:-1]:
        w_bytes += din * dout * bf16 + dout * f32
    last_in, _ = layer_dims[-1]
    w_bytes += last_in * f32 + f32
    w_bytes *= weight_buf_count
    # Streaming x / out tiles (double-buffered by the pipeline).
    io_bytes = 2 * (tm * emb * f32 + tm * f32)
    # Activation temporaries: f32 activations + bf16 casts of the widest layer.
    widest = max([emb] + [d for _, d in layer_dims])
    act_bytes = 2 * tm * widest * (f32 + bf16)
    total = int((w_bytes + io_bytes + act_bytes) * 1.25) + (4 << 20)
    cap = (56 << 20) if _is_v7x() else (100 << 20)
    return max(32 << 20, min(total, cap))


def _make_mlp_kernel(n_hidden_layers: int, negative_slope: float = 0.2):
    """Builds the per-tile kernel.

    Ref order:
      (x, w0, b0, ..., w_{H-1}, b_{H-1}, w_last_row, b_last, out)
    Hidden weights are bf16 [in, out] (pre-transposed vs. torch), hidden biases
    f32 [1, out], w_last_row f32 [1, last_in], b_last f32 [1, 1].
    out is a [TM, 1] f32 column (sigmoid outputs).
    """

    def kernel(*refs):
        x_ref = refs[0]
        out_ref = refs[-1]
        b_last_ref = refs[-2]
        w_last_ref = refs[-3]
        hidden_refs = refs[1:-3]
        assert len(hidden_refs) == 2 * n_hidden_layers

        h = x_ref[...]                                   # f32 [TM, emb]
        for i in range(n_hidden_layers):
            w = hidden_refs[2 * i][...]                  # bf16 [in, out]
            b = hidden_refs[2 * i + 1][...]              # f32  [1, out]
            h = jnp.dot(h.astype(jnp.bfloat16), w,
                        preferred_element_type=jnp.float32) + b
            # LeakyReLU(0.2): max-form (mul + max on the VPU).
            h = jnp.maximum(h, negative_slope * h)

        # Final Linear(hid -> 1) as a VPU multiply + cross-lane (XLU) reduction
        # instead of an N=1 MXU matmul.
        w_row = w_last_ref[...]                                  # f32 [1, last_in]
        logit = jnp.sum(h * w_row, axis=-1, keepdims=True)       # [TM, 1]
        logit = logit + b_last_ref[...]                          # [1, 1] broadcast

        # Sigmoid: exp + reciprocal on the EUP.  approx=False keeps full accuracy
        # (output may feed a BCE loss) at negligible cost.
        sig = pl.reciprocal(1.0 + jnp.exp(-logit), approx=False)  # [TM, 1]
        out_ref[...] = sig

    return kernel


def discriminator_forward(x, weights, biases, *, tm: int = 512):
    """x: [B, emb_dim] float32.
    weights[i]: [in_i, out_i] (already transposed vs. torch); biases[i]: [1, out_i] or [out_i].
    Returns sigmoid outputs of shape [B] (eval-mode: dropout = identity)."""
    assert x.ndim == 2
    n_linear = len(weights)
    n_hidden = n_linear - 1
    B, emb = x.shape

    # Adaptive batch tile: don't run the MLP on padding for tiny GAN-step batches.
    tm_eff = max(8, min(tm, _round_up(B, 8)))
    n_tiles = pl.cdiv(B, tm_eff)
    b_pad = n_tiles * tm_eff
    if b_pad != B:
        x = jnp.pad(x, ((0, b_pad - B), (0, 0)))

    # Flattened operand list: x, (w_i, b_i) for hidden layers, last row, last bias.
    flat_inputs = [x]
    resident_shapes = []
    for li in range(n_hidden):
        w = weights[li].astype(jnp.bfloat16)                     # [in, out]
        b = jnp.asarray(biases[li], jnp.float32).reshape(1, -1)  # [1, out]
        flat_inputs += [w, b]
        resident_shapes += [w.shape, b.shape]
    w_last = jnp.asarray(weights[-1], jnp.float32).reshape(1, -1)  # [1, last_in]
    b_last = jnp.asarray(biases[-1], jnp.float32).reshape(1, 1)    # [1, 1]
    flat_inputs += [w_last, b_last]
    resident_shapes += [w_last.shape, b_last.shape]

    layer_dims = [(int(w.shape[0]), int(w.shape[1])) for w in weights]

    # Advisory cost estimate.
    flops = 2 * b_pad * sum(din * dout for din, dout in layer_dims)
    bytes_weights = sum(din * dout * 2 + dout * 4 for din, dout in layer_dims[:-1]) \
        + layer_dims[-1][0] * 4 + 4
    bytes_accessed = b_pad * emb * 4 + bytes_weights + b_pad * 4
    cost = pl.CostEstimate(flops=int(flops), transcendentals=int(2 * b_pad),
                           bytes_accessed=int(bytes_accessed))

    kernel = _make_mlp_kernel(n_hidden)

    def run(single_buffer_weights: bool):
        def resident_spec(shape):
            if single_buffer_weights:
                return pl.BlockSpec(shape, lambda i: (0, 0),
                                    pipeline_mode=pl.Buffered(1))
            return pl.BlockSpec(shape, lambda i: (0, 0))

        in_specs = [pl.BlockSpec((tm_eff, emb), lambda i: (i, 0))]
        in_specs += [resident_spec(s) for s in resident_shapes]

        vmem_limit = _derive_vmem_limit(
            tm_eff, emb, layer_dims,
            weight_buf_count=1 if single_buffer_weights else 2)

        return pl.pallas_call(
            kernel,
            out_shape=jax.ShapeDtypeStruct((b_pad, 1), jnp.float32),
            grid=(n_tiles,),
            in_specs=in_specs,
            out_specs=pl.BlockSpec((tm_eff, 1), lambda i: (i, 0)),
            compiler_params=pltpu.CompilerParams(
                dimension_semantics=("parallel",),
                vmem_limit_bytes=vmem_limit,
            ),
            cost_estimate=cost,
        )(*flat_inputs)

    try:
        out = run(single_buffer_weights=True)
    except Exception:
        # Fallback if this jax build rejects pl.Buffered(1) single-buffering.
        out = run(single_buffer_weights=False)

    # [b_pad, 1] column -> drop batch padding, .view(-1).
    return out[:B, 0]


def init_params(key, emb_dim, dis_layers, dis_hid_dim):
    """Deterministic PyTorch-style Linear init (uniform(-1/sqrt(fan_in), ...))."""
    weights, biases = [], []
    for i in range(dis_layers + 1):
        in_dim = emb_dim if i == 0 else dis_hid_dim
        out_dim = 1 if i == dis_layers else dis_hid_dim
        key, kw, kb = jax.random.split(key, 3)
        bound = 1.0 / jnp.sqrt(jnp.float32(in_dim))
        # stored already transposed: [in_dim, out_dim]
        w = jax.random.uniform(kw, (in_dim, out_dim), jnp.float32, -bound, bound)
        b = jax.random.uniform(kb, (1, out_dim), jnp.float32, -bound, bound)
        weights.append(w)
        biases.append(b)
    return weights, biases


def reference_forward(x, weights, biases):
    """Pure-JAX f32 reference for correctness checking."""
    h = x
    n_linear = len(weights)
    for i, (w, b) in enumerate(zip(weights, biases)):
        h = h @ w + b
        if i < n_linear - 1:
            h = jnp.where(h > 0, h, 0.2 * h)
    return jax.nn.sigmoid(h).reshape(-1)


if __name__ == "__main__":
    # Small shapes consistent with the module (params.emb_dim, dis_layers, dis_hid_dim).
    B = 8
    emb_dim = 32
    dis_layers = 2
    dis_hid_dim = 64

    key = jax.random.PRNGKey(0)
    key, kx = jax.random.split(key)
    x = jax.random.normal(kx, (B, emb_dim), jnp.float32)

    weights, biases = init_params(key, emb_dim, dis_layers, dis_hid_dim)

    # Case 1: tiny batch (adaptive tile -> single 8-row tile, no wasted padding work).
    out = jax.block_until_ready(discriminator_forward(x, weights, biases))
    ref = reference_forward(x, weights, biases)
    assert out.shape == (B,), out.shape
    max_err = float(jnp.max(jnp.abs(out - ref)))
    assert max_err < 2e-2, (max_err, out, ref)

    # Case 2: multi-tile grid with batch padding (exercises resident weights
    # across grid steps and the padded-row slicing).
    B2 = 300
    key, kx2 = jax.random.split(key)
    x2 = jax.random.normal(kx2, (B2, emb_dim), jnp.float32)
    out2 = jax.block_until_ready(discriminator_forward(x2, weights, biases, tm=128))
    ref2 = reference_forward(x2, weights, biases)
    assert out2.shape == (B2,), out2.shape
    max_err2 = float(jnp.max(jnp.abs(out2 - ref2)))
    assert max_err2 < 2e-2, (max_err2,)

    print("KERNEL_OK")
</pallas_src>

<mosaic_0001>
module attributes {stable_mosaic.version = 11 : i64} {
  func.func @kernel(%arg0: i32, %arg1: memref<8x32xf32, #tpu.memory_space<vmem>>, %arg2: memref<32x64xbf16, #tpu.memory_space<vmem>>, %arg3: memref<1x64xf32, #tpu.memory_space<vmem>>, %arg4: memref<64x64xbf16, #tpu.memory_space<vmem>>, %arg5: memref<1x64xf32, #tpu.memory_space<vmem>>, %arg6: memref<1x64xf32, #tpu.memory_space<vmem>>, %arg7: memref<1x1xf32, #tpu.memory_space<vmem>>, %arg8: memref<8x1xf32, #tpu.memory_space<vmem>>) attributes {dimension_semantics = [#tpu.dimension_semantics<parallel>], iteration_bounds = array<i64: 1>, scalar_prefetch = 0 : i64, scratch_operands = 0 : i64, tpu.core_type = #tpu.core_type<tc>, window_params = [{transform_indices = @transform_0, window_bounds = array<i64: 8, 32>}, {pipeline_mode = #tpu.pipeline_mode<synchronous>, transform_indices = @transform_1, window_bounds = array<i64: 32, 64>}, {pipeline_mode = #tpu.pipeline_mode<synchronous>, transform_indices = @transform_2, window_bounds = array<i64: 1, 64>}, {pipeline_mode = #tpu.pipeline_mode<synchronous>, transform_indices = @transform_3, window_bounds = array<i64: 64, 64>}, {pipeline_mode = #tpu.pipeline_mode<synchronous>, transform_indices = @transform_4, window_bounds = array<i64: 1, 64>}, {pipeline_mode = #tpu.pipeline_mode<synchronous>, transform_indices = @transform_5, window_bounds = array<i64: 1, 64>}, {pipeline_mode = #tpu.pipeline_mode<synchronous>, transform_indices = @transform_6, window_bounds = array<i64: 1, 1>}, {transform_indices = @transform_7, window_bounds = array<i64: 8, 1>}]} {
    %c0 = arith.constant 0 : index
    %c0_0 = arith.constant 0 : index
    %0 = vector.load %arg1[%c0, %c0_0] : memref<8x32xf32, #tpu.memory_space<vmem>>, vector<8x32xf32>
    %c0_1 = arith.constant 0 : index
    %c0_2 = arith.constant 0 : index
    %1 = vector.load %arg2[%c0_1, %c0_2] : memref<32x64xbf16, #tpu.memory_space<vmem>>, vector<32x64xbf16>
    %c0_3 = arith.constant 0 : index
    %c0_4 = arith.constant 0 : index
    %2 = vector.load %arg3[%c0_3, %c0_4] : memref<1x64xf32, #tpu.memory_space<vmem>>, vector<1x64xf32>
    %3 = arith.truncf %0 : vector<8x32xf32> to vector<8x32xbf16>
    %cst = arith.constant dense<0.000000e+00> : vector<8x64xf32>
    %4 = tpu.matmul %3, %1, %cst {dimension_numbers = #tpu.dot_dimension_numbers<[1], [0], [0], [1], [0, 0, 1, 1], [], []>} : vector<8x32xbf16>, vector<32x64xbf16>, vector<8x64xf32> -> vector<8x64xf32>
    %5 = vector.broadcast %2 : vector<1x64xf32> to vector<8x64xf32>
    %6 = arith.addf %4, %5 : vector<8x64xf32>
    %cst_5 = arith.constant 2.000000e-01 : f32
    %7 = vector.broadcast %cst_5 : f32 to vector<8x64xf32>
    %8 = arith.mulf %7, %6 : vector<8x64xf32>
    %9 = arith.maximumf %6, %8 : vector<8x64xf32>
    %c0_6 = arith.constant 0 : index
    %c0_7 = arith.constant 0 : index
    %10 = vector.load %arg4[%c0_6, %c0_7] : memref<64x64xbf16, #tpu.memory_space<vmem>>, vector<64x64xbf16>
    %c0_8 = arith.constant 0 : index
    %c0_9 = arith.constant 0 : index
    %11 = vector.load %arg5[%c0_8, %c0_9] : memref<1x64xf32, #tpu.memory_space<vmem>>, vector<1x64xf32>
    %12 = arith.truncf %9 : vector<8x64xf32> to vector<8x64xbf16>
    %cst_10 = arith.constant dense<0.000000e+00> : vector<8x64xf32>
    %13 = tpu.matmul %12, %10, %cst_10 {dimension_numbers = #tpu.dot_dimension_numbers<[1], [0], [0], [1], [0, 0, 1, 1], [], []>} : vector<8x64xbf16>, vector<64x64xbf16>, vector<8x64xf32> -> vector<8x64xf32>
    %14 = vector.broadcast %11 : vector<1x64xf32> to vector<8x64xf32>
    %15 = arith.addf %13, %14 : vector<8x64xf32>
    %cst_11 = arith.constant 2.000000e-01 : f32
    %16 = vector.broadcast %cst_11 : f32 to vector<8x64xf32>
    %17 = arith.mulf %16, %15 : vector<8x64xf32>
    %18 = arith.maximumf %15, %17 : vector<8x64xf32>
    %c0_12 = arith.constant 0 : index
    %c0_13 = arith.constant 0 : index
    %19 = vector.load %arg6[%c0_12, %c0_13] : memref<1x64xf32, #tpu.memory_space<vmem>>, vector<1x64xf32>
    %20 = vector.broadcast %19 : vector<1x64xf32> to vector<8x64xf32>
    %21 = arith.mulf %18, %20 : vector<8x64xf32>
    %cst_14 = arith.constant dense<0.000000e+00> : vector<8xf32>
    %22 = vector.multi_reduction <add>, %21, %cst_14 [1] : vector<8x64xf32> to vector<8xf32>
    %23 = vector.shape_cast %22 : vector<8xf32> to vector<8x1xf32>
    %c0_15 = arith.constant 0 : index
    %c0_16 = arith.constant 0 : index
    %24 = vector.load %arg7[%c0_15, %c0_16] : memref<1x1xf32, #tpu.memory_space<vmem>>, vector<1x1xf32>
    %25 = vector.broadcast %24 : vector<1x1xf32> to vector<8x1xf32>
    %26 = arith.addf %23, %25 : vector<8x1xf32>
    %cst_17 = arith.constant 0.000000e+00 : f32
    %27 = vector.broadcast %cst_17 : f32 to vector<8x1xf32>
    %28 = arith.subf %27, %26 : vector<8x1xf32>
    %29 = math.exp %28 : vector<8x1xf32>
    %cst_18 = arith.constant 1.000000e+00 : f32
    %30 = vector.broadcast %cst_18 : f32 to vector<8x1xf32>
    %31 = arith.addf %30, %29 : vector<8x1xf32>
    %32 = tpu.reciprocal %31 : vector<8x1xf32> -> vector<8x1xf32>
    %c0_19 = arith.constant 0 : index
    %c0_20 = arith.constant 0 : index
    %33 = vector.load %arg8[%c0_19, %c0_20] : memref<8x1xf32, #tpu.memory_space<vmem>>, vector<8x1xf32>
    tpu.vector_store %arg8[%c0_19, %c0_20], %32 {strides = array<i32>} : memref<8x1xf32, #tpu.memory_space<vmem>>, vector<8x1xf32>,
    return
  }
  func.func @transform_0(%arg0: i32) -> (i32, i32) {
    %c0_i32 = arith.constant 0 : i32
    %c0_i32_0 = arith.constant 0 : i32
    return %arg0, %c0_i32 : i32, i32
  }
  func.func @transform_1(%arg0: i32) -> (i32, i32) {
    %c0_i32 = arith.constant 0 : i32
    %c0_i32_0 = arith.constant 0 : i32
    %c0_i32_1 = arith.constant 0 : i32
    return %c0_i32, %c0_i32_0 : i32, i32
  }
  func.func @transform_2(%arg0: i32) -> (i32, i32) {
    %c0_i32 = arith.constant 0 : i32
    %c0_i32_0 = arith.constant 0 : i32
    %c0_i32_1 = arith.constant 0 : i32
    return %c0_i32, %c0_i32_0 : i32, i32
  }
  func.func @transform_3(%arg0: i32) -> (i32, i32) {
    %c0_i32 = arith.constant 0 : i32
    %c0_i32_0 = arith.constant 0 : i32
    %c0_i32_1 = arith.constant 0 : i32
    return %c0_i32, %c0_i32_0 : i32, i32
  }
  func.func @transform_4(%arg0: i32) -> (i32, i32) {
    %c0_i32 = arith.constant 0 : i32
    %c0_i32_0 = arith.constant 0 : i32
    %c0_i32_1 = arith.constant 0 : i32
    return %c0_i32, %c0_i32_0 : i32, i32
  }
  func.func @transform_5(%arg0: i32) -> (i32, i32) {
    %c0_i32 = arith.constant 0 : i32
    %c0_i32_0 = arith.constant 0 : i32
    %c0_i32_1 = arith.constant 0 : i32
    return %c0_i32, %c0_i32_0 : i32, i32
  }
  func.func @transform_6(%arg0: i32) -> (i32, i32) {
    %c0_i32 = arith.constant 0 : i32
    %c0_i32_0 = arith.constant 0 : i32
    %c0_i32_1 = arith.constant 0 : i32
    return %c0_i32, %c0_i32_0 : i32, i32
  }
  func.func @transform_7(%arg0: i32) -> (i32, i32) {
    %c0_i32 = arith.constant 0 : i32
    %c0_i32_0 = arith.constant 0 : i32
    return %arg0, %c0_i32 : i32, i32
  }
}

module attributes {stable_mosaic.version = 11 : i64} {
  func.func @kernel(%arg0: i32, %arg1: memref<8x32xf32, #tpu.memory_space<vmem>>, %arg2: memref<32x64xbf16, #tpu.memory_space<vmem>>, %arg3: memref<1x64xf32, #tpu.memory_space<vmem>>, %arg4: memref<64x64xbf16, #tpu.memory_space<vmem>>, %arg5: memref<1x64xf32, #tpu.memory_space<vmem>>, %arg6: memref<1x64xf32, #tpu.memory_space<vmem>>, %arg7: memref<1x1xf32, #tpu.memory_space<vmem>>, %arg8: memref<8x1xf32, #tpu.memory_space<vmem>>) attributes {dimension_semantics = [#tpu.dimension_semantics<parallel>], iteration_bounds = array<i64: 1>, scalar_prefetch = 0 : i64, scratch_operands = 0 : i64, tpu.core_type = #tpu.core_type<tc>, window_params = [{transform_indices = @transform_0, window_bounds = array<i64: 8, 32>}, {pipeline_mode = #tpu.pipeline_mode<synchronous>, transform_indices = @transform_1, window_bounds = array<i64: 32, 64>}, {pipeline_mode = #tpu.pipeline_mode<synchronous>, transform_indices = @transform_2, window_bounds = array<i64: 1, 64>}, {pipeline_mode = #tpu.pipeline_mode<synchronous>, transform_indices = @transform_3, window_bounds = array<i64: 64, 64>}, {pipeline_mode = #tpu.pipeline_mode<synchronous>, transform_indices = @transform_4, window_bounds = array<i64: 1, 64>}, {pipeline_mode = #tpu.pipeline_mode<synchronous>, transform_indices = @transform_5, window_bounds = array<i64: 1, 64>}, {pipeline_mode = #tpu.pipeline_mode<synchronous>, transform_indices = @transform_6, window_bounds = array<i64: 1, 1>}, {transform_indices = @transform_7, window_bounds = array<i64: 8, 1>}]} {
    %c0 = arith.constant 0 : index
    %c0_0 = arith.constant 0 : index
    %0 = vector.load %arg1[%c0, %c0_0] : memref<8x32xf32, #tpu.memory_space<vmem>>, vector<8x32xf32>
    %c0_1 = arith.constant 0 : index
    %c0_2 = arith.constant 0 : index
    %1 = vector.load %arg2[%c0_1, %c0_2] : memref<32x64xbf16, #tpu.memory_space<vmem>>, vector<32x64xbf16>
    %c0_3 = arith.constant 0 : index
    %c0_4 = arith.constant 0 : index
    %2 = vector.load %arg3[%c0_3, %c0_4] : memref<1x64xf32, #tpu.memory_space<vmem>>, vector<1x64xf32>
    %3 = arith.truncf %0 : vector<8x32xf32> to vector<8x32xbf16>
    %cst = arith.constant dense<0.000000e+00> : vector<8x64xf32>
    %4 = tpu.matmul %3, %1, %cst {dimension_numbers = #tpu.dot_dimension_numbers<[1], [0], [0], [1], [0, 0, 1, 1], [], []>} : vector<8x32xbf16>, vector<32x64xbf16>, vector<8x64xf32> -> vector<8x64xf32>
    %5 = vector.broadcast %2 : vector<1x64xf32> to vector<8x64xf32>
    %6 = arith.addf %4, %5 : vector<8x64xf32>
    %cst_5 = arith.constant 2.000000e-01 : f32
    %7 = vector.broadcast %cst_5 : f32 to vector<8x64xf32>
    %8 = arith.mulf %7, %6 : vector<8x64xf32>
    %9 = arith.maximumf %6, %8 : vector<8x64xf32>
    %c0_6 = arith.constant 0 : index
    %c0_7 = arith.constant 0 : index
    %10 = vector.load %arg4[%c0_6, %c0_7] : memref<64x64xbf16, #tpu.memory_space<vmem>>, vector<64x64xbf16>
    %c0_8 = arith.constant 0 : index
    %c0_9 = arith.constant 0 : index
    %11 = vector.load %arg5[%c0_8, %c0_9] : memref<1x64xf32, #tpu.memory_space<vmem>>, vector<1x64xf32>
    %12 = arith.truncf %9 : vector<8x64xf32> to vector<8x64xbf16>
    %cst_10 = arith.constant dense<0.000000e+00> : vector<8x64xf32>
    %13 = tpu.matmul %12, %10, %cst_10 {dimension_numbers = #tpu.dot_dimension_numbers<[1], [0], [0], [1], [0, 0, 1, 1], [], []>} : vector<8x64xbf16>, vector<64x64xbf16>, vector<8x64xf32> -> vector<8x64xf32>
    %14 = vector.broadcast %11 : vector<1x64xf32> to vector<8x64xf32>
    %15 = arith.addf %13, %14 : vector<8x64xf32>
    %cst_11 = arith.constant 2.000000e-01 : f32
    %16 = vector.broadcast %cst_11 : f32 to vector<8x64xf32>
    %17 = arith.mulf %16, %15 : vector<8x64xf32>
    %18 = arith.maximumf %15, %17 : vector<8x64xf32>
    %c0_12 = arith.constant 0 : index
    %c0_13 = arith.constant 0 : index
    %19 = vector.load %arg6[%c0_12, %c0_13] : memref<1x64xf32, #tpu.memory_space<vmem>>, vector<1x64xf32>
    %20 = vector.broadcast %19 : vector<1x64xf32> to vector<8x64xf32>
    %21 = arith.mulf %18, %20 : vector<8x64xf32>
    %cst_14 = arith.constant dense<0.000000e+00> : vector<8xf32>
    %22 = vector.multi_reduction <add>, %21, %cst_14 [1] : vector<8x64xf32> to vector<8xf32>
    %23 = vector.shape_cast %22 : vector<8xf32> to vector<8x1xf32>
    %c0_15 = arith.constant 0 : index
    %c0_16 = arith.constant 0 : index
    %24 = vector.load %arg7[%c0_15, %c0_16] : memref<1x1xf32, #tpu.memory_space<vmem>>, vector<1x1xf32>
    %25 = vector.broadcast %24 : vector<1x1xf32> to vector<8x1xf32>
    %26 = arith.addf %23, %25 : vector<8x1xf32>
    %cst_17 = arith.constant 0.000000e+00 : f32
    %27 = vector.broadcast %cst_17 : f32 to vector<8x1xf32>
    %28 = arith.subf %27, %26 : vector<8x1xf32>
    %29 = math.exp %28 : vector<8x1xf32>
    %cst_18 = arith.constant 1.000000e+00 : f32
    %30 = vector.broadcast %cst_18 : f32 to vector<8x1xf32>
    %31 = arith.addf %30, %29 : vector<8x1xf32>
    %32 = tpu.reciprocal %31 : vector<8x1xf32> -> vector<8x1xf32>
    %c0_19 = arith.constant 0 : index
    %c0_20 = arith.constant 0 : index
    %33 = vector.load %arg8[%c0_19, %c0_20] : memref<8x1xf32, #tpu.memory_space<vmem>>, vector<8x1xf32>
    tpu.vector_store %arg8[%c0_19, %c0_20], %32 {strides = array<i32>} : memref<8x1xf32, #tpu.memory_space<vmem>>, vector<8x1xf32>,
    return
  }
  func.func @transform_0(%arg0: i32) -> (i32, i32) {
    %c0_i32 = arith.constant 0 : i32
    %c0_i32_0 = arith.constant 0 : i32
    return %arg0, %c0_i32 : i32, i32
  }
  func.func @transform_1(%arg0: i32) -> (i32, i32) {
    %c0_i32 = arith.constant 0 : i32
    %c0_i32_0 = arith.constant 0 : i32
    %c0_i32_1 = arith.constant 0 : i32
    return %c0_i32, %c0_i32_0 : i32, i32
  }
  func.func @transform_2(%arg0: i32) -> (i32, i32) {
    %c0_i32 = arith.constant 0 : i32
    %c0_i32_0 = arith.constant 0 : i32
    %c0_i32_1 = arith.constant 0 : i32
    return %c0_i32, %c0_i32_0 : i32, i32
  }
  func.func @transform_3(%arg0: i32) -> (i32, i32) {
    %c0_i32 = arith.constant 0 : i32
    %c0_i32_0 = arith.constant 0 : i32
    %c0_i32_1 = arith.constant 0 : i32
    return %c0_i32, %c0_i32_0 : i32, i32
  }
  func.func @transform_4(%arg0: i32) -> (i32, i32) {
    %c0_i32 = arith.constant 0 : i32
    %c0_i32_0 = arith.constant 0 : i32
    %c0_i32_1 = arith.constant 0 : i32
    return %c0_i32, %c0_i32_0 : i32, i32
  }
  func.func @transform_5(%arg0: i32) -> (i32, i32) {
    %c0_i32 = arith.constant 0 : i32
    %c0_i32_0 = arith.constant 0 : i32
    %c0_i32_1 = arith.constant 0 : i32
    return %c0_i32, %c0_i32_0 : i32, i32
  }
  func.func @transform_6(%arg0: i32) -> (i32, i32) {
    %c0_i32 = arith.constant 0 : i32
    %c0_i32_0 = arith.constant 0 : i32
    %c0_i32_1 = arith.constant 0 : i32
    return %c0_i32, %c0_i32_0 : i32, i32
  }
  func.func @transform_7(%arg0: i32) -> (i32, i32) {
    %c0_i32 = arith.constant 0 : i32
    %c0_i32_0 = arith.constant 0 : i32
    return %arg0, %c0_i32 : i32, i32
  }
}

</mosaic_0001>

<llo_original>
// kernel: tpu_custom_call.1
$region0: #{tpu_custom_call.1}
  #allocation0 [shape = 'u32[]', space=smem, size = 0x4, offset = 0x4, fixed_abs, tag = 'smem constant byte address 0x4 - core index']
  #allocation1 [shape = 'u32[144,128]{1,0:T(1,128)}', space=vmem, size = 0x12000, scoped, tag = 'internal scratch']
  #allocation2 [shape = 'f32[1,1]{1,0:T(1,128)S(1)}', space=vmem, size = 0x200, scoped, tag = 'scoped memory for tpu_custom_call.1']
  %s0 = inlined_call_operand.hbm [shape: f32[8,32], index: 0, kind: input, shape index: {}]
  %s1 = inlined_call_operand.hbm [shape: bf16[32,64], index: 1, kind: input, shape index: {}]
  %s2 = inlined_call_operand.vmem [shape: f32[1,64], index: 2, kind: input, shape index: {}]
  %s3 = inlined_call_operand.hbm [shape: bf16[64,64], index: 3, kind: input, shape index: {}]
  %s4 = inlined_call_operand.vmem [shape: f32[1,64], index: 4, kind: input, shape index: {}]
  %s5 = inlined_call_operand.vmem [shape: f32[1,64], index: 5, kind: input, shape index: {}]
  %s6 = inlined_call_operand.<no memory space> [shape: f32[1,1], index: 6, kind: input, shape index: {}]
  %s7 = inlined_call_operand.vmem [shape: f32[8,1], index: 7, kind: output, shape index: {}]
  %s8 = sld [smem:[#allocation0]]
  $region50: #{tpu_custom_call.1} parent=0
    _
  %s10 = ssub.s32 1, %s8
  %s11 = scalar_select 0, %s10, %s8
  %v12 = vstv %s6
  %13 = vst [vmem:[#allocation2] sm:$0x1] %v12
  $region1: #{tpu_custom_call.1} parent=0
    #allocation3 [shape = 'u8[4096]{0}', space=vmem, size = 0x1000, scoped, tag = 'input window, operand 0, single buffered']
    #allocation4 [shape = 's32[1]{0}', space=sflag, size = 0x4, scoped, tag = 'scoped memory for tpu_custom_call.1']
    #allocation5 [shape = 'u8[8192]{0}', space=vmem, size = 0x2000, scoped, tag = 'input window, operand 1, single buffered']
    #allocation6 [shape = 's32[1]{0}', space=sflag, size = 0x4, scoped, tag = 'scoped memory for tpu_custom_call.1']
    #allocation7 [shape = 'u8[16384]{0}', space=vmem, size = 0x4000, scoped, tag = 'input window, operand 3, single buffered']
    %14 = vsyncpa [#allocation4], 0
    %15 = vsyncpa [#allocation6], 0
    // Predicated region
    $region2: #{tpu_custom_call.1} parent=1 // pred_check
      _
    $region3: #{tpu_custom_call.1} parent=1 // pred_check_branch
      %17 = sbr.rel (0) target = $region5
    $region4: #{tpu_custom_call.1} parent=1 // pred_region
      %s19 = ssub.s32 128, 128
      %20 = vsyncadd [#allocation4], %s19
      %s22 = sshll.u32 [#allocation3], 4
      %s23 = int_to_ptr.vmem [resolvable:$true] %s22
      %25 = dma.hbm_to_vmem [thread:$0]  %s0, 128, %s23, [#allocation4]
    $region5: #{tpu_custom_call.1} parent=1 // pred_fallthru
      _
    // Predicated region
    $region6: #{tpu_custom_call.1} parent=1 // pred_check
      _
    $region7: #{tpu_custom_call.1} parent=1 // pred_check_branch
      %27 = sbr.rel (0) target = $region9
    $region8: #{tpu_custom_call.1} parent=1 // pred_region
      %s29 = ssub.s32 256, 256
      %30 = vsyncadd [#allocation6], %s29
      %s31 = sshll.u32 [#allocation5], 4
      %s32 = int_to_ptr.vmem [resolvable:$true] %s31
      %37 = dma.hbm_to_vmem [thread:$0]  %s1, 256, %s32, [#allocation6], 64, 64, 4
    $region9: #{tpu_custom_call.1} parent=1 // pred_fallthru
      _
    // Predicated region
    $region10: #{tpu_custom_call.1} parent=1 // pred_check
      _
    $region11: #{tpu_custom_call.1} parent=1 // pred_check_branch
      %39 = sbr.rel (0) target = $region13
    $region12: #{tpu_custom_call.1} parent=1 // pred_region
      _
    $region13: #{tpu_custom_call.1} parent=1 // pred_fallthru
      _
    // Predicated region
    $region14: #{tpu_custom_call.1} parent=1 // pred_check
      _
    $region15: #{tpu_custom_call.1} parent=1 // pred_check_branch
      %41 = sbr.rel (0) target = $region17
    $region16: #{tpu_custom_call.1} parent=1 // pred_region
      %s43 = ssub.s32 512, 512
      %44 = vsyncadd [#allocation6], %s43
      %s45 = sshll.u32 [#allocation7], 4
      %s46 = int_to_ptr.vmem [resolvable:$true] %s45
      %51 = dma.hbm_to_vmem [thread:$0]  %s3, 512, %s46, [#allocation6], 64, 64, 4
    $region17: #{tpu_custom_call.1} parent=1 // pred_fallthru
      _
    // Predicated region
    $region18: #{tpu_custom_call.1} parent=1 // pred_check
      _
    $region19: #{tpu_custom_call.1} parent=1 // pred_check_branch
      %53 = sbr.rel (0) target = $region21
    $region20: #{tpu_custom_call.1} parent=1 // pred_region
      _
    $region21: #{tpu_custom_call.1} parent=1 // pred_fallthru
      _
    // Predicated region
    $region22: #{tpu_custom_call.1} parent=1 // pred_check
      _
    $region23: #{tpu_custom_call.1} parent=1 // pred_check_branch
      %55 = sbr.rel (0) target = $region25
    $region24: #{tpu_custom_call.1} parent=1 // pred_region
      _
    $region25: #{tpu_custom_call.1} parent=1 // pred_fallthru
      _
    // Predicated region
    $region26: #{tpu_custom_call.1} parent=1 // pred_check
      _
    $region27: #{tpu_custom_call.1} parent=1 // pred_check_branch
      %57 = sbr.rel (0) target = $region29
    $region28: #{tpu_custom_call.1} parent=1 // pred_region
      _
    $region29: #{tpu_custom_call.1} parent=1 // pred_fallthru
      _
    // Predicated region
    $region30: #{tpu_custom_call.1} parent=1 // pred_check
      _
    $region31: #{tpu_custom_call.1} parent=1 // pred_check_branch
      %59 = sbr.rel (0) target = $region33
    $region32: #{tpu_custom_call.1} parent=1 // pred_region
      %60 = dma.done [#allocation4], 128
    $region33: #{tpu_custom_call.1} parent=1 // pred_fallthru
      _
    // Predicated region
    $region34: #{tpu_custom_call.1} parent=1 // pred_check
      _
    $region35: #{tpu_custom_call.1} parent=1 // pred_check_branch
      %62 = sbr.rel (0) target = $region37
    $region36: #{tpu_custom_call.1} parent=1 // pred_region
      %63 = dma.done [#allocation6], 256
    $region37: #{tpu_custom_call.1} parent=1 // pred_fallthru
      _
    // Predicated region
    $region38: #{tpu_custom_call.1} parent=1 // pred_check
      _
    $region39: #{tpu_custom_call.1} parent=1 // pred_check_branch
      %65 = sbr.rel (0) target = $region41
    $region40: #{tpu_custom_call.1} parent=1 // pred_region
      %66 = dma.done [#allocation6], 512
    $region41: #{tpu_custom_call.1} parent=1 // pred_fallthru
      _
    %v68 = vld [vmem:[#allocation3] sm:$0xff]
    %v69 = vld [vmem:[#allocation5] sm:$0xf]
    %v70 = vld [vmem:[#allocation5 + $0x4] sm:$0xf]
    %v71 = vld [vmem:[#allocation5 + $0x8] sm:$0xf]
    %v72 = vld [vmem:[#allocation5 + $0xc] sm:$0xf]
    %v73 = vld [vmem:[%s2] sm:$0x1]
    %v74 = vpack.c.bf16 %v68, %v68
    %v76 = vlaneseq
    %v77 = vshrl.u32 %v76, 7
    %v78 = vsub.s32 0, %v77
    %v79 = vrot.slane %v73, %v78
    %v85 = vunpack.c.l.b16 %v69
    %v86 = vunpack.c.l.b16 %v70
    %v87 = vunpack.c.l.b16 %v71
    %v88 = vunpack.c.l.b16 %v72
    %v89 = vpack.c.b16 %v86, %v85
    %v90 = vpack.c.b16 %v88, %v87
    %vm93 = vcmask 261120
    %v95 = vsel %vm93, %v74, 0
    %97 = vmatprep.subr.bf16.mxu0 0
    %98 = vmatpush1.bf16.msra.mxu0 %v89
    %99 = vmatprep.subr.bf16.mxu0 0
    %100 = vmatpush1.bf16.msra.mxu0 %v90
    %101 = vmatprep.subr.bf16.mxu0 0
    %102 = vmatpush1.bf16.msra.mxu0 0
    %103 = vmatprep.subr.bf16.mxu0 0
    %104 = vmatpush1.bf16.msra.mxu0 0
    %105 = vmatprep.subr.bf16.mxu0 0
    %106 = vmatpush1.bf16.msra.mxu0 0
    %107 = vmatprep.subr.bf16.mxu0 0
    %108 = vmatpush1.bf16.msra.mxu0 0
    %109 = vmatprep.subr.bf16.mxu0 0
    %110 = vmatpush1.bf16.msra.mxu0 0
    %111 = vmatprep.subr.bf16.mxu0 0
    %112 = vmatpush1.bf16.msra.mxu0 0
    %113 = vmatprep.subr.bf16.mxu0 0
    %114 = vmatpush1.bf16.msra.mxu0 0
    %115 = vmatprep.subr.bf16.mxu0 0
    %116 = vmatpush1.bf16.msra.mxu0 0
    %117 = vmatprep.subr.bf16.mxu0 0
    %118 = vmatpush1.bf16.msra.mxu0 0
    %119 = vmatprep.subr.bf16.mxu0 0
    %120 = vmatpush1.bf16.msra.mxu0 0
    %121 = vmatprep.subr.bf16.mxu0 0
    %122 = vmatpush1.bf16.msra.mxu0 0
    %123 = vmatprep.subr.bf16.mxu0 0
    %124 = vmatpush1.bf16.msra.mxu0 0
    %125 = vmatprep.subr.bf16.mxu0 0
    %126 = vmatpush1.bf16.msra.mxu0 0
    %127 = vmatprep.subr.bf16.mxu0 0
    %128 = vmatpush1.bf16.msra.mxu0 0
    %129 = vmatprep.mubr.bf16.mxu0 0
    %130 = vmatmul.mubr.bf16.gmra.mrb[0].mxu0 %v95
    %v131 = vpop.f32.mrb[0].mxu0
    %v132 = vadd.f32 %v79, %v131
    %v133 = vpop.f32.mrb[0].mxu0
    %v134 = vpop.f32.mrb[0].mxu0
    %v135 = vpop.f32.mrb[0].mxu0
    %136 = vdwg.mxu0
    %v137 = vmul.f32 %v132, 0.2
    %v138 = vmax.f32 %v132, %v137
    %v139 = vld [vmem:[#allocation7] sm:$0xf]
    %v140 = vld [vmem:[#allocation7 + $0x4] sm:$0xf]
    %v141 = vld [vmem:[#allocation7 + $0x8] sm:$0xf]
    %v142 = vld [vmem:[#allocation7 + $0xc] sm:$0xf]
    %v143 = vld [vmem:[#allocation7 + $0x10] sm:$0xf]
    %v144 = vld [vmem:[#allocation7 + $0x14] sm:$0xf]
    %v145 = vld [vmem:[#allocation7 + $0x18] sm:$0xf]
    %v146 = vld [vmem:[#allocation7 + $0x1c] sm:$0xf]
    %v147 = vld [vmem:[%s4] sm:$0x1]
    %v148 = vpack.c.bf16 %v138, %v138
    %v150 = vlaneseq
    %v151 = vshrl.u32 %v150, 7
    %v152 = vsub.s32 0, %v151
    %v153 = vrot.slane %v147, %v152
    %v163 = vunpack.c.l.b16 %v139
    %v164 = vunpack.c.l.b16 %v140
    %v165 = vunpack.c.l.b16 %v141
    %v166 = vunpack.c.l.b16 %v142
    %v167 = vunpack.c.l.b16 %v143
    %v168 = vunpack.c.l.b16 %v144
    %v169 = vunpack.c.l.b16 %v145
    %v170 = vunpack.c.l.b16 %v146
    %v171 = vpack.c.b16 %v164, %v163
    %v172 = vpack.c.b16 %v166, %v165
    %v173 = vpack.c.b16 %v168, %v167
    %v174 = vpack.c.b16 %v170, %v169
    %vm179 = vcmask 523264
    %v181 = vsel %vm179, %v148, 0
    %183 = vmatprep.subr.bf16.mxu0 0
    %184 = vmatpush1.bf16.msra.mxu0 %v171
    %185 = vmatprep.subr.bf16.mxu0 0
    %186 = vmatpush1.bf16.msra.mxu0 %v172
    %187 = vmatprep.subr.bf16.mxu0 0
    %188 = vmatpush1.bf16.msra.mxu0 %v173
    %189 = vmatprep.subr.bf16.mxu0 0
    %190 = vmatpush1.bf16.msra.mxu0 %v174
    %191 = vmatprep.subr.bf16.mxu0 0
    %192 = vmatpush1.bf16.msra.mxu0 0
    %193 = vmatprep.subr.bf16.mxu0 0
    %194 = vmatpush1.bf16.msra.mxu0 0
    %195 = vmatprep.subr.bf16.mxu0 0
    %196 = vmatpush1.bf16.msra.mxu0 0
    %197 = vmatprep.subr.bf16.mxu0 0
    %198 = vmatpush1.bf16.msra.mxu0 0
    %199 = vmatprep.subr.bf16.mxu0 0
    %200 = vmatpush1.bf16.msra.mxu0 0
    %201 = vmatprep.subr.bf16.mxu0 0
    %202 = vmatpush1.bf16.msra.mxu0 0
    %203 = vmatprep.subr.bf16.mxu0 0
    %204 = vmatpush1.bf16.msra.mxu0 0
    %205 = vmatprep.subr.bf16.mxu0 0
    %206 = vmatpush1.bf16.msra.mxu0 0
    %207 = vmatprep.subr.bf16.mxu0 0
    %208 = vmatpush1.bf16.msra.mxu0 0
    %209 = vmatprep.subr.bf16.mxu0 0
    %210 = vmatpush1.bf16.msra.mxu0 0
    %211 = vmatprep.subr.bf16.mxu0 0
    %212 = vmatpush1.bf16.msra.mxu0 0
    %213 = vmatprep.subr.bf16.mxu0 0
    %214 = vmatpush1.bf16.msra.mxu0 0
    %215 = vmatprep.mubr.bf16.mxu0 0
    %216 = vmatmul.mubr.bf16.gmra.mrb[0].mxu0 %v181
    %v217 = vpop.f32.mrb[0].mxu0
    %v218 = vadd.f32 %v153, %v217
    %v219 = vpop.f32.mrb[0].mxu0
    %v220 = vpop.f32.mrb[0].mxu0
    %v221 = vpop.f32.mrb[0].mxu0
    %222 = vdwg.mxu0
    %v223 = vmul.f32 %v218, 0.2
    %v224 = vmax.f32 %v218, %v223
    %v225 = vld [vmem:[%s5] sm:$0x1]
    %v227 = vlaneseq
    %v228 = vshrl.u32 %v227, 7
    %v229 = vsub.s32 0, %v228
    %v230 = vrot.slane %v225, %v229
    %v232 = vmul.f32 %v224, %v230
    %v233 = vsel %vm179, %v232, 0.0
    %234 = vadd.xlane.f32.xlu0 %v233
    %v235 = vpop.xlane.xlu0 %234
    %v236 = vld [vmem:[#allocation2] sm:$0x1]
    %v238 = vlaneseq
    %v239 = vshrl.u32 %v238, 7
    %v240 = vsub.s32 0, %v239
    %v241 = vrot.slane %v236, %v240
    %v243 = vadd.f32 %v235, %v241
    %v244 = vsub.f32 0.0, %v243
    %v245 = vmul.f32 %v244, 1.442695
    %v246 = vpow.pop %v245
    %v247 = vadd.f32 %v246, 1.0
    %v248 = vrcp.pop %v247
    %vm249 = vcmask 7168
    %250 = vst.msk [vmem:[%s7] sm:$0xff] %vm249, %v248
    // Predicated region
    $region42: #{tpu_custom_call.1} parent=1 // pred_check
      _
    $region43: #{tpu_custom_call.1} parent=1 // pred_check_branch
      %252 = sbr.rel (0) target = $region45
    $region44: #{tpu_custom_call.1} parent=1 // pred_region
      _
    $region45: #{tpu_custom_call.1} parent=1 // pred_fallthru
      _
    // Predicated region
    $region46: #{tpu_custom_call.1} parent=1 // pred_check
      _
    $region47: #{tpu_custom_call.1} parent=1 // pred_check_branch
      %254 = sbr.rel (0) target = $region49
    $region48: #{tpu_custom_call.1} parent=1 // pred_region
      _
    $region49: #{tpu_custom_call.1} parent=1 // pred_fallthru
      _
    %255 = vsyncpa [#allocation4], 1
    %256 = vsyncpa [#allocation6], 1

// kernel: tpu_custom_call.1
$region0: #{tpu_custom_call.1}
  #allocation0 [shape = 'u32[]', space=smem, size = 0x4, offset = 0x4, fixed_abs, tag = 'smem constant byte address 0x4 - core index']
  #allocation1 [shape = 'u32[144,128]{1,0:T(1,128)}', space=vmem, size = 0x12000, scoped, tag = 'internal scratch']
  #allocation2 [shape = 'f32[1,1]{1,0:T(1,128)S(1)}', space=vmem, size = 0x200, scoped, tag = 'scoped memory for tpu_custom_call.1']
  %s0 = inlined_call_operand.hbm [shape: f32[8,32], index: 0, kind: input, shape index: {}]
  %s1 = inlined_call_operand.hbm [shape: bf16[32,64], index: 1, kind: input, shape index: {}]
  %s2 = inlined_call_operand.vmem [shape: f32[1,64], index: 2, kind: input, shape index: {}]
  %s3 = inlined_call_operand.hbm [shape: bf16[64,64], index: 3, kind: input, shape index: {}]
  %s4 = inlined_call_operand.vmem [shape: f32[1,64], index: 4, kind: input, shape index: {}]
  %s5 = inlined_call_operand.vmem [shape: f32[1,64], index: 5, kind: input, shape index: {}]
  %s6 = inlined_call_operand.<no memory space> [shape: f32[1,1], index: 6, kind: input, shape index: {}]
  %s7 = inlined_call_operand.vmem [shape: f32[8,1], index: 7, kind: output, shape index: {}]
  %s8 = sld [smem:[#allocation0]]
  $region50: #{tpu_custom_call.1} parent=0
    _
  %s10 = ssub.s32 1, %s8
  %s11 = scalar_select 0, %s10, %s8
  %v12 = vstv %s6
  %13 = vst [vmem:[#allocation2] sm:$0x1] %v12
  $region1: #{tpu_custom_call.1} parent=0
    #allocation3 [shape = 'u8[4096]{0}', space=vmem, size = 0x1000, scoped, tag = 'input window, operand 0, single buffered']
    #allocation4 [shape = 's32[1]{0}', space=sflag, size = 0x4, scoped, tag = 'scoped memory for tpu_custom_call.1']
    #allocation5 [shape = 'u8[8192]{0}', space=vmem, size = 0x2000, scoped, tag = 'input window, operand 1, single buffered']
    #allocation6 [shape = 's32[1]{0}', space=sflag, size = 0x4, scoped, tag = 'scoped memory for tpu_custom_call.1']
    #allocation7 [shape = 'u8[16384]{0}', space=vmem, size = 0x4000, scoped, tag = 'input window, operand 3, single buffered']
    %14 = vsyncpa [#allocation4], 0
    %15 = vsyncpa [#allocation6], 0
    // Predicated region
    $region2: #{tpu_custom_call.1} parent=1 // pred_check
      _
    $region3: #{tpu_custom_call.1} parent=1 // pred_check_branch
      %17 = sbr.rel (0) target = $region5
    $region4: #{tpu_custom_call.1} parent=1 // pred_region
      %s19 = ssub.s32 128, 128
      %20 = vsyncadd [#allocation4], %s19
      %s22 = sshll.u32 [#allocation3], 4
      %s23 = int_to_ptr.vmem [resolvable:$true] %s22
      %25 = dma.hbm_to_vmem [thread:$0]  %s0, 128, %s23, [#allocation4]
    $region5: #{tpu_custom_call.1} parent=1 // pred_fallthru
      _
    // Predicated region
    $region6: #{tpu_custom_call.1} parent=1 // pred_check
      _
    $region7: #{tpu_custom_call.1} parent=1 // pred_check_branch
      %27 = sbr.rel (0) target = $region9
    $region8: #{tpu_custom_call.1} parent=1 // pred_region
      %s29 = ssub.s32 256, 256
      %30 = vsyncadd [#allocation6], %s29
      %s31 = sshll.u32 [#allocation5], 4
      %s32 = int_to_ptr.vmem [resolvable:$true] %s31
      %37 = dma.hbm_to_vmem [thread:$0]  %s1, 256, %s32, [#allocation6], 64, 64, 4
    $region9: #{tpu_custom_call.1} parent=1 // pred_fallthru
      _
    // Predicated region
    $region10: #{tpu_custom_call.1} parent=1 // pred_check
      _
    $region11: #{tpu_custom_call.1} parent=1 // pred_check_branch
      %39 = sbr.rel (0) target = $region13
    $region12: #{tpu_custom_call.1} parent=1 // pred_region
      _
    $region13: #{tpu_custom_call.1} parent=1 // pred_fallthru
      _
    // Predicated region
    $region14: #{tpu_custom_call.1} parent=1 // pred_check
      _
    $region15: #{tpu_custom_call.1} parent=1 // pred_check_branch
      %41 = sbr.rel (0) target = $region17
    $region16: #{tpu_custom_call.1} parent=1 // pred_region
      %s43 = ssub.s32 512, 512
      %44 = vsyncadd [#allocation6], %s43
      %s45 = sshll.u32 [#allocation7], 4
      %s46 = int_to_ptr.vmem [resolvable:$true] %s45
      %51 = dma.hbm_to_vmem [thread:$0]  %s3, 512, %s46, [#allocation6], 64, 64, 4
    $region17: #{tpu_custom_call.1} parent=1 // pred_fallthru
      _
    // Predicated region
    $region18: #{tpu_custom_call.1} parent=1 // pred_check
      _
    $region19: #{tpu_custom_call.1} parent=1 // pred_check_branch
      %53 = sbr.rel (0) target = $region21
    $region20: #{tpu_custom_call.1} parent=1 // pred_region
      _
    $region21: #{tpu_custom_call.1} parent=1 // pred_fallthru
      _
    // Predicated region
    $region22: #{tpu_custom_call.1} parent=1 // pred_check
      _
    $region23: #{tpu_custom_call.1} parent=1 // pred_check_branch
      %55 = sbr.rel (0) target = $region25
    $region24: #{tpu_custom_call.1} parent=1 // pred_region
      _
    $region25: #{tpu_custom_call.1} parent=1 // pred_fallthru
      _
    // Predicated region
    $region26: #{tpu_custom_call.1} parent=1 // pred_check
      _
    $region27: #{tpu_custom_call.1} parent=1 // pred_check_branch
      %57 = sbr.rel (0) target = $region29
    $region28: #{tpu_custom_call.1} parent=1 // pred_region
      _
    $region29: #{tpu_custom_call.1} parent=1 // pred_fallthru
      _
    // Predicated region
    $region30: #{tpu_custom_call.1} parent=1 // pred_check
      _
    $region31: #{tpu_custom_call.1} parent=1 // pred_check_branch
      %59 = sbr.rel (0) target = $region33
    $region32: #{tpu_custom_call.1} parent=1 // pred_region
      %60 = dma.done [#allocation4], 128
    $region33: #{tpu_custom_call.1} parent=1 // pred_fallthru
      _
    // Predicated region
    $region34: #{tpu_custom_call.1} parent=1 // pred_check
      _
    $region35: #{tpu_custom_call.1} parent=1 // pred_check_branch
      %62 = sbr.rel (0) target = $region37
    $region36: #{tpu_custom_call.1} parent=1 // pred_region
      %63 = dma.done [#allocation6], 256
    $region37: #{tpu_custom_call.1} parent=1 // pred_fallthru
      _
    // Predicated region
    $region38: #{tpu_custom_call.1} parent=1 // pred_check
      _
    $region39: #{tpu_custom_call.1} parent=1 // pred_check_branch
      %65 = sbr.rel (0) target = $region41
    $region40: #{tpu_custom_call.1} parent=1 // pred_region
      %66 = dma.done [#allocation6], 512
    $region41: #{tpu_custom_call.1} parent=1 // pred_fallthru
      _
    %v68 = vld [vmem:[#allocation3] sm:$0xff]
    %v69 = vld [vmem:[#allocation5] sm:$0xf]
    %v70 = vld [vmem:[#allocation5 + $0x4] sm:$0xf]
    %v71 = vld [vmem:[#allocation5 + $0x8] sm:$0xf]
    %v72 = vld [vmem:[#allocation5 + $0xc] sm:$0xf]
    %v73 = vld [vmem:[%s2] sm:$0x1]
    %v74 = vpack.c.bf16 %v68, %v68
    %v76 = vlaneseq
    %v77 = vshrl.u32 %v76, 7
    %v78 = vsub.s32 0, %v77
    %v79 = vrot.slane %v73, %v78
    %v85 = vunpack.c.l.b16 %v69
    %v86 = vunpack.c.l.b16 %v70
    %v87 = vunpack.c.l.b16 %v71
    %v88 = vunpack.c.l.b16 %v72
    %v89 = vpack.c.b16 %v86, %v85
    %v90 = vpack.c.b16 %v88, %v87
    %vm93 = vcmask 261120
    %v95 = vsel %vm93, %v74, 0
    %97 = vmatprep.subr.bf16.mxu0 0
    %98 = vmatpush1.bf16.msra.mxu0 %v89
    %99 = vmatprep.subr.bf16.mxu0 0
    %100 = vmatpush1.bf16.msra.mxu0 %v90
    %101 = vmatprep.subr.bf16.mxu0 0
    %102 = vmatpush1.bf16.msra.mxu0 0
    %103 = vmatprep.subr.bf16.mxu0 0
    %104 = vmatpush1.bf16.msra.mxu0 0
    %105 = vmatprep.subr.bf16.mxu0 0
    %106 = vmatpush1.bf16.msra.mxu0 0
    %107 = vmatprep.subr.bf16.mxu0 0
    %108 = vmatpush1.bf16.msra.mxu0 0
    %109 = vmatprep.subr.bf16.mxu0 0
    %110 = vmatpush1.bf16.msra.mxu0 0
    %111 = vmatprep.subr.bf16.mxu0 0
    %112 = vmatpush1.bf16.msra.mxu0 0
    %113 = vmatprep.subr.bf16.mxu0 0
    %114 = vmatpush1.bf16.msra.mxu0 0
    %115 = vmatprep.subr.bf16.mxu0 0
    %116 = vmatpush1.bf16.msra.mxu0 0
    %117 = vmatprep.subr.bf16.mxu0 0
    %118 = vmatpush1.bf16.msra.mxu0 0
    %119 = vmatprep.subr.bf16.mxu0 0
    %120 = vmatpush1.bf16.msra.mxu0 0
    %121 = vmatprep.subr.bf16.mxu0 0
    %122 = vmatpush1.bf16.msra.mxu0 0
    %123 = vmatprep.subr.bf16.mxu0 0
    %124 = vmatpush1.bf16.msra.mxu0 0
    %125 = vmatprep.subr.bf16.mxu0 0
    %126 = vmatpush1.bf16.msra.mxu0 0
    %127 = vmatprep.subr.bf16.mxu0 0
    %128 = vmatpush1.bf16.msra.mxu0 0
    %129 = vmatprep.mubr.bf16.mxu0 0
    %130 = vmatmul.mubr.bf16.gmra.mrb[0].mxu0 %v95
    %v131 = vpop.f32.mrb[0].mxu0
    %v132 = vadd.f32 %v79, %v131
    %v133 = vpop.f32.mrb[0].mxu0
    %v134 = vpop.f32.mrb[0].mxu0
    %v135 = vpop.f32.mrb[0].mxu0
    %136 = vdwg.mxu0
    %v137 = vmul.f32 %v132, 0.2
    %v138 = vmax.f32 %v132, %v137
    %v139 = vld [vmem:[#allocation7] sm:$0xf]
    %v140 = vld [vmem:[#allocation7 + $0x4] sm:$0xf]
    %v141 = vld [vmem:[#allocation7 + $0x8] sm:$0xf]
    %v142 = vld [vmem:[#allocation7 + $0xc] sm:$0xf]
    %v143 = vld [vmem:[#allocation7 + $0x10] sm:$0xf]
    %v144 = vld [vmem:[#allocation7 + $0x14] sm:$0xf]
    %v145 = vld [vmem:[#allocation7 + $0x18] sm:$0xf]
    %v146 = vld [vmem:[#allocation7 + $0x1c] sm:$0xf]
    %v147 = vld [vmem:[%s4] sm:$0x1]
    %v148 = vpack.c.bf16 %v138, %v138
    %v150 = vlaneseq
    %v151 = vshrl.u32 %v150, 7
    %v152 = vsub.s32 0, %v151
    %v153 = vrot.slane %v147, %v152
    %v163 = vunpack.c.l.b16 %v139
    %v164 = vunpack.c.l.b16 %v140
    %v165 = vunpack.c.l.b16 %v141
    %v166 = vunpack.c.l.b16 %v142
    %v167 = vunpack.c.l.b16 %v143
    %v168 = vunpack.c.l.b16 %v144
    %v169 = vunpack.c.l.b16 %v145
    %v170 = vunpack.c.l.b16 %v146
    %v171 = vpack.c.b16 %v164, %v163
    %v172 = vpack.c.b16 %v166, %v165
    %v173 = vpack.c.b16 %v168, %v167
    %v174 = vpack.c.b16 %v170, %v169
    %vm179 = vcmask 523264
    %v181 = vsel %vm179, %v148, 0
    %183 = vmatprep.subr.bf16.mxu0 0
    %184 = vmatpush1.bf16.msra.mxu0 %v171
    %185 = vmatprep.subr.bf16.mxu0 0
    %186 = vmatpush1.bf16.msra.mxu0 %v172
    %187 = vmatprep.subr.bf16.mxu0 0
    %188 = vmatpush1.bf16.msra.mxu0 %v173
    %189 = vmatprep.subr.bf16.mxu0 0
    %190 = vmatpush1.bf16.msra.mxu0 %v174
    %191 = vmatprep.subr.bf16.mxu0 0
    %192 = vmatpush1.bf16.msra.mxu0 0
    %193 = vmatprep.subr.bf16.mxu0 0
    %194 = vmatpush1.bf16.msra.mxu0 0
    %195 = vmatprep.subr.bf16.mxu0 0
    %196 = vmatpush1.bf16.msra.mxu0 0
    %197 = vmatprep.subr.bf16.mxu0 0
    %198 = vmatpush1.bf16.msra.mxu0 0
    %199 = vmatprep.subr.bf16.mxu0 0
    %200 = vmatpush1.bf16.msra.mxu0 0
    %201 = vmatprep.subr.bf16.mxu0 0
    %202 = vmatpush1.bf16.msra.mxu0 0
    %203 = vmatprep.subr.bf16.mxu0 0
    %204 = vmatpush1.bf16.msra.mxu0 0
    %205 = vmatprep.subr.bf16.mxu0 0
    %206 = vmatpush1.bf16.msra.mxu0 0
    %207 = vmatprep.subr.bf16.mxu0 0
    %208 = vmatpush1.bf16.msra.mxu0 0
    %209 = vmatprep.subr.bf16.mxu0 0
    %210 = vmatpush1.bf16.msra.mxu0 0
    %211 = vmatprep.subr.bf16.mxu0 0
    %212 = vmatpush1.bf16.msra.mxu0 0
    %213 = vmatprep.subr.bf16.mxu0 0
    %214 = vmatpush1.bf16.msra.mxu0 0
    %215 = vmatprep.mubr.bf16.mxu0 0
    %216 = vmatmul.mubr.bf16.gmra.mrb[0].mxu0 %v181
    %v217 = vpop.f32.mrb[0].mxu0
    %v218 = vadd.f32 %v153, %v217
    %v219 = vpop.f32.mrb[0].mxu0
    %v220 = vpop.f32.mrb[0].mxu0
    %v221 = vpop.f32.mrb[0].mxu0
    %222 = vdwg.mxu0
    %v223 = vmul.f32 %v218, 0.2
    %v224 = vmax.f32 %v218, %v223
    %v225 = vld [vmem:[%s5] sm:$0x1]
    %v227 = vlaneseq
    %v228 = vshrl.u32 %v227, 7
    %v229 = vsub.s32 0, %v228
    %v230 = vrot.slane %v225, %v229
    %v232 = vmul.f32 %v224, %v230
    %v233 = vsel %vm179, %v232, 0.0
    %234 = vadd.xlane.f32.xlu0 %v233
    %v235 = vpop.xlane.xlu0 %234
    %v236 = vld [vmem:[#allocation2] sm:$0x1]
    %v238 = vlaneseq
    %v239 = vshrl.u32 %v238, 7
    %v240 = vsub.s32 0, %v239
    %v241 = vrot.slane %v236, %v240
    %v243 = vadd.f32 %v235, %v241
    %v244 = vsub.f32 0.0, %v243
    %v245 = vmul.f32 %v244, 1.442695
    %v246 = vpow.pop %v245
    %v247 = vadd.f32 %v246, 1.0
    %v248 = vrcp.pop %v247
    %vm249 = vcmask 7168
    %250 = vst.msk [vmem:[%s7] sm:$0xff] %vm249, %v248
    // Predicated region
    $region42: #{tpu_custom_call.1} parent=1 // pred_check
      _
    $region43: #{tpu_custom_call.1} parent=1 // pred_check_branch
      %252 = sbr.rel (0) target = $region45
    $region44: #{tpu_custom_call.1} parent=1 // pred_region
      _
    $region45: #{tpu_custom_call.1} parent=1 // pred_fallthru
      _
    // Predicated region
    $region46: #{tpu_custom_call.1} parent=1 // pred_check
      _
    $region47: #{tpu_custom_call.1} parent=1 // pred_check_branch
      %254 = sbr.rel (0) target = $region49
    $region48: #{tpu_custom_call.1} parent=1 // pred_region
      _
    $region49: #{tpu_custom_call.1} parent=1 // pred_fallthru
      _
    %255 = vsyncpa [#allocation4], 1
    %256 = vsyncpa [#allocation6], 1

</llo_original>
